<compile_context>
chip_gen: v6e
topology: v6e:2x2x1
jax: 0.10.0
libtpu: 0.0.40
codegen_flags: <defaults>
</compile_context>

<pallas_src>
import jax
import jax.numpy as jnp
from jax.experimental import pallas as pl
from jax.experimental.pallas import tpu as pltpu

THRESHOLD = 1.0  # snn.Leaky default


def _make_snn_kernel(time_chunk: int, batch_tile: int, num_inputs: int,
                     num_hidden: int, num_outputs: int, beta: float,
                     threshold: float):
    beta = float(beta)   # Python scalars -> trace-time literals (no captured jnp consts)
    thr = float(threshold)
    tc, bt = time_chunk, batch_tile

    def snn_kernel(x_ref, w1_ref, b1_ref, w2_ref, b2_ref,
                   spk_ref, mem_ref, mem1_sc, mem2_sc):
        c = pl.program_id(1)  # time-chunk index (sequential / "arbitrary" axis)

        # init_leaky() -> zeros at the start of every batch tile's time sweep.
        @pl.when(c == 0)
        def _():
            mem1_sc[...] = jnp.zeros_like(mem1_sc)
            mem2_sc[...] = jnp.zeros_like(mem2_sc)

        # Loop-invariant loads (weights/biases resident across the whole grid).
        w1 = w1_ref[...]                     # (In, H)
        w2 = w2_ref[...]                     # (H, O)
        b1 = b1_ref[...]                     # (1, H)  -> broadcasts over rows
        b2 = b2_ref[...]                     # (1, O)

        # ---- FC1 for the whole chunk: one MXU matmul, M = Tc*bt rows. ------
        x_all = x_ref[0].reshape(tc * bt, num_inputs)          # (Tc*bt, In)
        cur1_all = jnp.dot(x_all, w1,
                           preferred_element_type=jnp.float32) + b1

        # ---- LIF1 recurrence: pure VPU, unrolled over the chunk. ------------
        mem1 = mem1_sc[...]
        spk1_parts = []
        for t in range(tc):
            cur1 = cur1_all[t * bt:(t + 1) * bt]                # (bt, H) static slice
            reset1 = (mem1 > thr).astype(jnp.float32)
            mem1 = beta * mem1 + cur1 - reset1 * thr
            spk1_parts.append((mem1 > thr).astype(jnp.float32))
        mem1_sc[...] = mem1                                     # carry to next chunk

        # ---- FC2 for the whole chunk: one MXU matmul over stacked spikes. ---
        spk1_all = jnp.concatenate(spk1_parts, axis=0)          # (Tc*bt, H)
        cur2_all = jnp.dot(spk1_all, w2,
                           preferred_element_type=jnp.float32) + b2

        # ---- LIF2 recurrence: pure VPU. --------------------------------------
        mem2 = mem2_sc[...]
        spk2_parts, mem2_parts = [], []
        for t in range(tc):
            cur2 = cur2_all[t * bt:(t + 1) * bt]                # (bt, O)
            reset2 = (mem2 > thr).astype(jnp.float32)
            mem2 = beta * mem2 + cur2 - reset2 * thr
            spk2_parts.append((mem2 > thr).astype(jnp.float32))
            mem2_parts.append(mem2)
        mem2_sc[...] = mem2                                     # carry to next chunk

        # Single dense store per slab per chunk (no per-step masked stores).
        spk_ref[0] = jnp.concatenate(spk2_parts, axis=1)        # (bt, Tc*O)
        mem_ref[0] = jnp.concatenate(mem2_parts, axis=1)        # (bt, Tc*O)

    return snn_kernel


def _vmem_limit_bytes(tc, bt, num_inputs, num_hidden, num_outputs):
    """Rough VMEM budget: pipelined blocks (x2 for double-buffering) + resident
    weights + scratch, with generous headroom. Keeps us explicit on v7x."""
    def tile_bytes(r, c):
        rr = ((max(r, 1) + 7) // 8) * 8
        cc = ((max(c, 1) + 127) // 128) * 128
        return rr * cc * 4
    per_chunk = (tile_bytes(tc * bt, num_inputs)
                 + 2 * tile_bytes(bt, tc * num_outputs))
    resident = (tile_bytes(num_inputs, num_hidden) + tile_bytes(1, num_hidden)
                + tile_bytes(num_hidden, num_outputs) + tile_bytes(1, num_outputs)
                + tile_bytes(bt, num_hidden) + tile_bytes(bt, num_outputs))
    est = 2 * per_chunk + resident
    return int(min(max(4 * est, 16 * 1024 * 1024), 64 * 1024 * 1024))


def snn_net_forward(x, w1, b1, w2, b2, *, beta, threshold=THRESHOLD,
                    time_chunk=None, batch_tile=None):
    """x: [num_steps, batch, num_inputs]; w1: [num_inputs, num_hidden];
    b1: [1, num_hidden]; w2: [num_hidden, num_outputs]; b2: [1, num_outputs].
    Returns (spk2_rec, mem2_rec), each [num_steps, batch, num_outputs]."""
    num_steps, batch, num_inputs = x.shape
    num_hidden = w1.shape[1]
    num_outputs = w2.shape[1]

    tc = num_steps if time_chunk is None else int(time_chunk)
    bt = batch if batch_tile is None else int(batch_tile)
    assert num_steps % tc == 0, "time_chunk must divide num_steps"
    assert batch % bt == 0, "batch_tile must divide batch"
    if bt != batch:
        assert bt % 8 == 0, "sub-batch tiles must be sublane-aligned (multiple of 8)"
    num_chunks = num_steps // tc
    num_btiles = batch // bt

    # Free leading-dim split; no data-rewriting pad of x.
    x_r = x.reshape(num_chunks, tc, batch, num_inputs).astype(jnp.float32)

    kernel = _make_snn_kernel(tc, bt, num_inputs, num_hidden, num_outputs,
                              beta, threshold)

    slab = tc * num_outputs  # NOTE: at other sizes prefer tc*O a multiple of 128
    out_shape = (
        jax.ShapeDtypeStruct((num_chunks, batch, slab), jnp.float32),  # spk2
        jax.ShapeDtypeStruct((num_chunks, batch, slab), jnp.float32),  # mem2
    )

    grid_spec = pltpu.PrefetchScalarGridSpec(
        num_scalar_prefetch=0,
        grid=(num_btiles, num_chunks),
        in_specs=[
            pl.BlockSpec((1, tc, bt, num_inputs), lambda bi, c: (c, 0, bi, 0)),
            pl.BlockSpec((num_inputs, num_hidden), lambda bi, c: (0, 0)),
            pl.BlockSpec((1, num_hidden), lambda bi, c: (0, 0)),
            pl.BlockSpec((num_hidden, num_outputs), lambda bi, c: (0, 0)),
            pl.BlockSpec((1, num_outputs), lambda bi, c: (0, 0)),
        ],
        out_specs=(
            pl.BlockSpec((1, bt, slab), lambda bi, c: (c, bi, 0)),
            pl.BlockSpec((1, bt, slab), lambda bi, c: (c, bi, 0)),
        ),
        scratch_shapes=[
            pltpu.VMEM((bt, num_hidden), jnp.float32),   # mem1 carry
            pltpu.VMEM((bt, num_outputs), jnp.float32),  # mem2 carry
        ],
    )

    spk_slab, mem_slab = pl.pallas_call(
        kernel,
        out_shape=out_shape,
        grid_spec=grid_spec,
        compiler_params=pltpu.CompilerParams(
            dimension_semantics=("parallel", "arbitrary"),
            vmem_limit_bytes=_vmem_limit_bytes(tc, bt, num_inputs, num_hidden,
                                               num_outputs),
        ),
    )(x_r, w1.astype(jnp.float32), b1.astype(jnp.float32),
      w2.astype(jnp.float32), b2.astype(jnp.float32))

    def _unslab(s):  # (nc, B, tc*O) -> (T, B, O)
        return (s.reshape(num_chunks, batch, tc, num_outputs)
                 .transpose(0, 2, 1, 3)
                 .reshape(num_steps, batch, num_outputs))

    return _unslab(spk_slab), _unslab(mem_slab)


def _reference_forward(x, w1, b1, w2, b2, *, beta, threshold=THRESHOLD):
    """Pure-JAX reference of the PyTorch forward, for a sanity check."""
    num_steps, batch, _ = x.shape
    mem1 = jnp.zeros((batch, w1.shape[1]), jnp.float32)
    mem2 = jnp.zeros((batch, w2.shape[1]), jnp.float32)
    spk2_rec, mem2_rec = [], []
    for t in range(num_steps):
        cur1 = x[t] @ w1 + b1[0]
        r1 = (mem1 > threshold).astype(jnp.float32)
        mem1 = beta * mem1 + cur1 - r1 * threshold
        spk1 = (mem1 > threshold).astype(jnp.float32)
        cur2 = spk1 @ w2 + b2[0]
        r2 = (mem2 > threshold).astype(jnp.float32)
        mem2 = beta * mem2 + cur2 - r2 * threshold
        spk2 = (mem2 > threshold).astype(jnp.float32)
        spk2_rec.append(spk2)
        mem2_rec.append(mem2)
    return jnp.stack(spk2_rec, 0), jnp.stack(mem2_rec, 0)


if __name__ == "__main__":
    # Small, module-consistent shapes.
    num_steps, batch = 8, 8
    num_inputs, num_hidden, num_outputs = 32, 64, 16
    beta = 0.9

    key = jax.random.PRNGKey(0)
    kx, kw1, kb1, kw2, kb2 = jax.random.split(key, 5)

    # Deterministic parameter init (nn.Linear weights stored as [in, out]).
    x = jax.random.normal(kx, (num_steps, batch, num_inputs), jnp.float32)
    w1 = jax.random.normal(kw1, (num_inputs, num_hidden), jnp.float32) * 0.3
    b1 = jax.random.normal(kb1, (1, num_hidden), jnp.float32) * 0.1
    w2 = jax.random.normal(kw2, (num_hidden, num_outputs), jnp.float32) * 0.3
    b2 = jax.random.normal(kb2, (1, num_outputs), jnp.float32) * 0.1

    # time_chunk=4 -> grid=(1, 2): exercises the pipelined time axis and the
    # cross-chunk membrane carry; batch_tile defaults to the full batch.
    spk2_rec, mem2_rec = snn_net_forward(x, w1, b1, w2, b2, beta=beta,
                                         time_chunk=4)
    spk2_rec = jax.block_until_ready(spk2_rec)
    mem2_rec = jax.block_until_ready(mem2_rec)

    # Correctness check against a pure-JAX reference of the PyTorch loop.
    ref_spk, ref_mem = _reference_forward(x, w1, b1, w2, b2, beta=beta)
    assert spk2_rec.shape == (num_steps, batch, num_outputs)
    assert mem2_rec.shape == (num_steps, batch, num_outputs)
    assert jnp.allclose(spk2_rec, ref_spk), "spike record mismatch"
    assert jnp.allclose(mem2_rec, ref_mem, atol=1e-5), "membrane record mismatch"

    print("KERNEL_OK")
</pallas_src>

<mosaic_0001>
module attributes {stable_mosaic.version = 11 : i64} {
  func.func @snn_kernel(%arg0: i32, %arg1: i32, %arg2: memref<1x4x8x32xf32, #tpu.memory_space<vmem>>, %arg3: memref<32x64xf32, #tpu.memory_space<vmem>>, %arg4: memref<1x64xf32, #tpu.memory_space<vmem>>, %arg5: memref<64x16xf32, #tpu.memory_space<vmem>>, %arg6: memref<1x16xf32, #tpu.memory_space<vmem>>, %arg7: memref<1x8x64xf32, #tpu.memory_space<vmem>>, %arg8: memref<1x8x64xf32, #tpu.memory_space<vmem>>, %arg9: memref<8x64xf32, #tpu.memory_space<vmem>>, %arg10: memref<8x16xf32, #tpu.memory_space<vmem>>) attributes {dimension_semantics = [#tpu.dimension_semantics<parallel>, #tpu.dimension_semantics<arbitrary>], iteration_bounds = array<i64: 1, 2>, scalar_prefetch = 0 : i64, scratch_operands = 2 : i64, tpu.core_type = #tpu.core_type<tc>, window_params = [{transform_indices = @transform_0, window_bounds = array<i64: 1, 4, 8, 32>}, {pipeline_mode = #tpu.pipeline_mode<synchronous>, transform_indices = @transform_1, window_bounds = array<i64: 32, 64>}, {pipeline_mode = #tpu.pipeline_mode<synchronous>, transform_indices = @transform_2, window_bounds = array<i64: 1, 64>}, {pipeline_mode = #tpu.pipeline_mode<synchronous>, transform_indices = @transform_3, window_bounds = array<i64: 64, 16>}, {pipeline_mode = #tpu.pipeline_mode<synchronous>, transform_indices = @transform_4, window_bounds = array<i64: 1, 16>}, {transform_indices = @transform_5, window_bounds = array<i64: 1, 8, 64>}, {transform_indices = @transform_6, window_bounds = array<i64: 1, 8, 64>}]} {
    %c0_i32 = arith.constant 0 : i32
    %0 = arith.cmpi eq, %arg1, %c0_i32 : i32
    %1 = arith.extui %0 : i1 to i32
    %c0_i32_0 = arith.constant 0 : i32
    %2 = arith.cmpi ne, %1, %c0_i32_0 : i32
    scf.if %2 {
      %cst_59 = arith.constant 0.000000e+00 : f32
      %149 = vector.broadcast %cst_59 : f32 to vector<8x64xf32>
      %c0_60 = arith.constant 0 : index
      %c0_61 = arith.constant 0 : index
      %150 = vector.load %arg9[%c0_60, %c0_61] : memref<8x64xf32, #tpu.memory_space<vmem>>, vector<8x64xf32>
      tpu.vector_store %arg9[%c0_60, %c0_61], %149 {strides = array<i32>} : memref<8x64xf32, #tpu.memory_space<vmem>>, vector<8x64xf32>,
      %cst_62 = arith.constant 0.000000e+00 : f32
      %151 = vector.broadcast %cst_62 : f32 to vector<8x16xf32>
      %c0_63 = arith.constant 0 : index
      %c0_64 = arith.constant 0 : index
      %152 = vector.load %arg10[%c0_63, %c0_64] : memref<8x16xf32, #tpu.memory_space<vmem>>, vector<8x16xf32>
      tpu.vector_store %arg10[%c0_63, %c0_64], %151 {strides = array<i32>} : memref<8x16xf32, #tpu.memory_space<vmem>>, vector<8x16xf32>,
    } else {
    }
    %c0 = arith.constant 0 : index
    %c0_1 = arith.constant 0 : index
    %3 = vector.load %arg3[%c0, %c0_1] : memref<32x64xf32, #tpu.memory_space<vmem>>, vector<32x64xf32>
    %c0_2 = arith.constant 0 : index
    %c0_3 = arith.constant 0 : index
    %4 = vector.load %arg5[%c0_2, %c0_3] : memref<64x16xf32, #tpu.memory_space<vmem>>, vector<64x16xf32>
    %c0_4 = arith.constant 0 : index
    %c0_5 = arith.constant 0 : index
    %5 = vector.load %arg4[%c0_4, %c0_5] : memref<1x64xf32, #tpu.memory_space<vmem>>, vector<1x64xf32>
    %c0_6 = arith.constant 0 : index
    %c0_7 = arith.constant 0 : index
    %6 = vector.load %arg6[%c0_6, %c0_7] : memref<1x16xf32, #tpu.memory_space<vmem>>, vector<1x16xf32>
    %c0_8 = arith.constant 0 : index
    %c0_9 = arith.constant 0 : index
    %c0_10 = arith.constant 0 : index
    %c0_11 = arith.constant 0 : index
    %7 = vector.load %arg2[%c0_8, %c0_9, %c0_10, %c0_11] : memref<1x4x8x32xf32, #tpu.memory_space<vmem>>, vector<1x4x8x32xf32>
    %8 = vector.shape_cast %7 : vector<1x4x8x32xf32> to vector<4x8x32xf32>
    %9 = vector.shape_cast %8 : vector<4x8x32xf32> to vector<32x32xf32>
    %cst = arith.constant dense<0.000000e+00> : vector<32x64xf32>
    %10 = tpu.matmul %9, %3, %cst {dimension_numbers = #tpu.dot_dimension_numbers<[1], [0], [0], [1], [0, 0, 1, 1], [], []>} : vector<32x32xf32>, vector<32x64xf32>, vector<32x64xf32> -> vector<32x64xf32>
    %11 = vector.broadcast %5 : vector<1x64xf32> to vector<32x64xf32>
    %12 = arith.addf %10, %11 : vector<32x64xf32>
    %c0_12 = arith.constant 0 : index
    %c0_13 = arith.constant 0 : index
    %13 = vector.load %arg9[%c0_12, %c0_13] : memref<8x64xf32, #tpu.memory_space<vmem>>, vector<8x64xf32>
    %14 = vector.extract_strided_slice %12 {offsets = [0, 0], sizes = [8, 64], strides = [1, 1]} : vector<32x64xf32> to vector<8x64xf32>
    %cst_14 = arith.constant 1.000000e+00 : f32
    %15 = vector.broadcast %cst_14 : f32 to vector<8x64xf32>
    %16 = arith.cmpf ogt, %13, %15 : vector<8x64xf32>
    %17 = arith.extui %16 : vector<8x64xi1> to vector<8x64xi32>
    %18 = arith.sitofp %17 : vector<8x64xi32> to vector<8x64xf32>
    %cst_15 = arith.constant 0.899999976 : f32
    %19 = vector.broadcast %cst_15 : f32 to vector<8x64xf32>
    %20 = arith.mulf %19, %13 : vector<8x64xf32>
    %21 = arith.addf %20, %14 : vector<8x64xf32>
    %cst_16 = arith.constant 1.000000e+00 : f32
    %22 = vector.broadcast %cst_16 : f32 to vector<8x64xf32>
    %23 = arith.mulf %18, %22 : vector<8x64xf32>
    %24 = arith.subf %21, %23 : vector<8x64xf32>
    %cst_17 = arith.constant 1.000000e+00 : f32
    %25 = vector.broadcast %cst_17 : f32 to vector<8x64xf32>
    %26 = arith.cmpf ogt, %24, %25 : vector<8x64xf32>
    %27 = arith.extui %26 : vector<8x64xi1> to vector<8x64xi32>
    %28 = arith.sitofp %27 : vector<8x64xi32> to vector<8x64xf32>
    %29 = vector.extract_strided_slice %12 {offsets = [8, 0], sizes = [8, 64], strides = [1, 1]} : vector<32x64xf32> to vector<8x64xf32>
    %cst_18 = arith.constant 1.000000e+00 : f32
    %30 = vector.broadcast %cst_18 : f32 to vector<8x64xf32>
    %31 = arith.cmpf ogt, %24, %30 : vector<8x64xf32>
    %32 = arith.extui %31 : vector<8x64xi1> to vector<8x64xi32>
    %33 = arith.sitofp %32 : vector<8x64xi32> to vector<8x64xf32>
    %cst_19 = arith.constant 0.899999976 : f32
    %34 = vector.broadcast %cst_19 : f32 to vector<8x64xf32>
    %35 = arith.mulf %34, %24 : vector<8x64xf32>
    %36 = arith.addf %35, %29 : vector<8x64xf32>
    %cst_20 = arith.constant 1.000000e+00 : f32
    %37 = vector.broadcast %cst_20 : f32 to vector<8x64xf32>
    %38 = arith.mulf %33, %37 : vector<8x64xf32>
    %39 = arith.subf %36, %38 : vector<8x64xf32>
    %cst_21 = arith.constant 1.000000e+00 : f32
    %40 = vector.broadcast %cst_21 : f32 to vector<8x64xf32>
    %41 = arith.cmpf ogt, %39, %40 : vector<8x64xf32>
    %42 = arith.extui %41 : vector<8x64xi1> to vector<8x64xi32>
    %43 = arith.sitofp %42 : vector<8x64xi32> to vector<8x64xf32>
    %44 = vector.extract_strided_slice %12 {offsets = [16, 0], sizes = [8, 64], strides = [1, 1]} : vector<32x64xf32> to vector<8x64xf32>
    %cst_22 = arith.constant 1.000000e+00 : f32
    %45 = vector.broadcast %cst_22 : f32 to vector<8x64xf32>
    %46 = arith.cmpf ogt, %39, %45 : vector<8x64xf32>
    %47 = arith.extui %46 : vector<8x64xi1> to vector<8x64xi32>
    %48 = arith.sitofp %47 : vector<8x64xi32> to vector<8x64xf32>
    %cst_23 = arith.constant 0.899999976 : f32
    %49 = vector.broadcast %cst_23 : f32 to vector<8x64xf32>
    %50 = arith.mulf %49, %39 : vector<8x64xf32>
    %51 = arith.addf %50, %44 : vector<8x64xf32>
    %cst_24 = arith.constant 1.000000e+00 : f32
    %52 = vector.broadcast %cst_24 : f32 to vector<8x64xf32>
    %53 = arith.mulf %48, %52 : vector<8x64xf32>
    %54 = arith.subf %51, %53 : vector<8x64xf32>
    %cst_25 = arith.constant 1.000000e+00 : f32
    %55 = vector.broadcast %cst_25 : f32 to vector<8x64xf32>
    %56 = arith.cmpf ogt, %54, %55 : vector<8x64xf32>
    %57 = arith.extui %56 : vector<8x64xi1> to vector<8x64xi32>
    %58 = arith.sitofp %57 : vector<8x64xi32> to vector<8x64xf32>
    %59 = vector.extract_strided_slice %12 {offsets = [24, 0], sizes = [8, 64], strides = [1, 1]} : vector<32x64xf32> to vector<8x64xf32>
    %cst_26 = arith.constant 1.000000e+00 : f32
    %60 = vector.broadcast %cst_26 : f32 to vector<8x64xf32>
    %61 = arith.cmpf ogt, %54, %60 : vector<8x64xf32>
    %62 = arith.extui %61 : vector<8x64xi1> to vector<8x64xi32>
    %63 = arith.sitofp %62 : vector<8x64xi32> to vector<8x64xf32>
    %cst_27 = arith.constant 0.899999976 : f32
    %64 = vector.broadcast %cst_27 : f32 to vector<8x64xf32>
    %65 = arith.mulf %64, %54 : vector<8x64xf32>
    %66 = arith.addf %65, %59 : vector<8x64xf32>
    %cst_28 = arith.constant 1.000000e+00 : f32
    %67 = vector.broadcast %cst_28 : f32 to vector<8x64xf32>
    %68 = arith.mulf %63, %67 : vector<8x64xf32>
    %69 = arith.subf %66, %68 : vector<8x64xf32>
    %cst_29 = arith.constant 1.000000e+00 : f32
    %70 = vector.broadcast %cst_29 : f32 to vector<8x64xf32>
    %71 = arith.cmpf ogt, %69, %70 : vector<8x64xf32>
    %72 = arith.extui %71 : vector<8x64xi1> to vector<8x64xi32>
    %73 = arith.sitofp %72 : vector<8x64xi32> to vector<8x64xf32>
    %c0_30 = arith.constant 0 : index
    %c0_31 = arith.constant 0 : index
    %74 = vector.load %arg9[%c0_30, %c0_31] : memref<8x64xf32, #tpu.memory_space<vmem>>, vector<8x64xf32>
    tpu.vector_store %arg9[%c0_30, %c0_31], %69 {strides = array<i32>} : memref<8x64xf32, #tpu.memory_space<vmem>>, vector<8x64xf32>,
    %75 = tpu.concatenate %28, %43, %58, %73 in 0 : vector<8x64xf32>, vector<8x64xf32>, vector<8x64xf32>, vector<8x64xf32> -> vector<32x64xf32>
    %cst_32 = arith.constant dense<0.000000e+00> : vector<32x16xf32>
    %76 = tpu.matmul %75, %4, %cst_32 {dimension_numbers = #tpu.dot_dimension_numbers<[1], [0], [0], [1], [0, 0, 1, 1], [], []>} : vector<32x64xf32>, vector<64x16xf32>, vector<32x16xf32> -> vector<32x16xf32>
    %77 = vector.broadcast %6 : vector<1x16xf32> to vector<32x16xf32>
    %78 = arith.addf %76, %77 : vector<32x16xf32>
    %c0_33 = arith.constant 0 : index
    %c0_34 = arith.constant 0 : index
    %79 = vector.load %arg10[%c0_33, %c0_34] : memref<8x16xf32, #tpu.memory_space<vmem>>, vector<8x16xf32>
    %80 = vector.extract_strided_slice %78 {offsets = [0, 0], sizes = [8, 16], strides = [1, 1]} : vector<32x16xf32> to vector<8x16xf32>
    %cst_35 = arith.constant 1.000000e+00 : f32
    %81 = vector.broadcast %cst_35 : f32 to vector<8x16xf32>
    %82 = arith.cmpf ogt, %79, %81 : vector<8x16xf32>
    %83 = arith.extui %82 : vector<8x16xi1> to vector<8x16xi32>
    %84 = arith.sitofp %83 : vector<8x16xi32> to vector<8x16xf32>
    %cst_36 = arith.constant 0.899999976 : f32
    %85 = vector.broadcast %cst_36 : f32 to vector<8x16xf32>
    %86 = arith.mulf %85, %79 : vector<8x16xf32>
    %87 = arith.addf %86, %80 : vector<8x16xf32>
    %cst_37 = arith.constant 1.000000e+00 : f32
    %88 = vector.broadcast %cst_37 : f32 to vector<8x16xf32>
    %89 = arith.mulf %84, %88 : vector<8x16xf32>
    %90 = arith.subf %87, %89 : vector<8x16xf32>
    %cst_38 = arith.constant 1.000000e+00 : f32
    %91 = vector.broadcast %cst_38 : f32 to vector<8x16xf32>
    %92 = arith.cmpf ogt, %90, %91 : vector<8x16xf32>
    %93 = arith.extui %92 : vector<8x16xi1> to vector<8x16xi32>
    %94 = arith.sitofp %93 : vector<8x16xi32> to vector<8x16xf32>
    %95 = vector.extract_strided_slice %78 {offsets = [8, 0], sizes = [8, 16], strides = [1, 1]} : vector<32x16xf32> to vector<8x16xf32>
    %cst_39 = arith.constant 1.000000e+00 : f32
    %96 = vector.broadcast %cst_39 : f32 to vector<8x16xf32>
    %97 = arith.cmpf ogt, %90, %96 : vector<8x16xf32>
    %98 = arith.extui %97 : vector<8x16xi1> to vector<8x16xi32>
    %99 = arith.sitofp %98 : vector<8x16xi32> to vector<8x16xf32>
    %cst_40 = arith.constant 0.899999976 : f32
    %100 = vector.broadcast %cst_40 : f32 to vector<8x16xf32>
    %101 = arith.mulf %100, %90 : vector<8x16xf32>
    %102 = arith.addf %101, %95 : vector<8x16xf32>
    %cst_41 = arith.constant 1.000000e+00 : f32
    %103 = vector.broadcast %cst_41 : f32 to vector<8x16xf32>
    %104 = arith.mulf %99, %103 : vector<8x16xf32>
    %105 = arith.subf %102, %104 : vector<8x16xf32>
    %cst_42 = arith.constant 1.000000e+00 : f32
    %106 = vector.broadcast %cst_42 : f32 to vector<8x16xf32>
    %107 = arith.cmpf ogt, %105, %106 : vector<8x16xf32>
    %108 = arith.extui %107 : vector<8x16xi1> to vector<8x16xi32>
    %109 = arith.sitofp %108 : vector<8x16xi32> to vector<8x16xf32>
    %110 = vector.extract_strided_slice %78 {offsets = [16, 0], sizes = [8, 16], strides = [1, 1]} : vector<32x16xf32> to vector<8x16xf32>
    %cst_43 = arith.constant 1.000000e+00 : f32
    %111 = vector.broadcast %cst_43 : f32 to vector<8x16xf32>
    %112 = arith.cmpf ogt, %105, %111 : vector<8x16xf32>
    %113 = arith.extui %112 : vector<8x16xi1> to vector<8x16xi32>
    %114 = arith.sitofp %113 : vector<8x16xi32> to vector<8x16xf32>
    %cst_44 = arith.constant 0.899999976 : f32
    %115 = vector.broadcast %cst_44 : f32 to vector<8x16xf32>
    %116 = arith.mulf %115, %105 : vector<8x16xf32>
    %117 = arith.addf %116, %110 : vector<8x16xf32>
    %cst_45 = arith.constant 1.000000e+00 : f32
    %118 = vector.broadcast %cst_45 : f32 to vector<8x16xf32>
    %119 = arith.mulf %114, %118 : vector<8x16xf32>
    %120 = arith.subf %117, %119 : vector<8x16xf32>
    %cst_46 = arith.constant 1.000000e+00 : f32
    %121 = vector.broadcast %cst_46 : f32 to vector<8x16xf32>
    %122 = arith.cmpf ogt, %120, %121 : vector<8x16xf32>
    %123 = arith.extui %122 : vector<8x16xi1> to vector<8x16xi32>
    %124 = arith.sitofp %123 : vector<8x16xi32> to vector<8x16xf32>
    %125 = vector.extract_strided_slice %78 {offsets = [24, 0], sizes = [8, 16], strides = [1, 1]} : vector<32x16xf32> to vector<8x16xf32>
    %cst_47 = arith.constant 1.000000e+00 : f32
    %126 = vector.broadcast %cst_47 : f32 to vector<8x16xf32>
    %127 = arith.cmpf ogt, %120, %126 : vector<8x16xf32>
    %128 = arith.extui %127 : vector<8x16xi1> to vector<8x16xi32>
    %129 = arith.sitofp %128 : vector<8x16xi32> to vector<8x16xf32>
    %cst_48 = arith.constant 0.899999976 : f32
    %130 = vector.broadcast %cst_48 : f32 to vector<8x16xf32>
    %131 = arith.mulf %130, %120 : vector<8x16xf32>
    %132 = arith.addf %131, %125 : vector<8x16xf32>
    %cst_49 = arith.constant 1.000000e+00 : f32
    %133 = vector.broadcast %cst_49 : f32 to vector<8x16xf32>
    %134 = arith.mulf %129, %133 : vector<8x16xf32>
    %135 = arith.subf %132, %134 : vector<8x16xf32>
    %cst_50 = arith.constant 1.000000e+00 : f32
    %136 = vector.broadcast %cst_50 : f32 to vector<8x16xf32>
    %137 = arith.cmpf ogt, %135, %136 : vector<8x16xf32>
    %138 = arith.extui %137 : vector<8x16xi1> to vector<8x16xi32>
    %139 = arith.sitofp %138 : vector<8x16xi32> to vector<8x16xf32>
    %c0_51 = arith.constant 0 : index
    %c0_52 = arith.constant 0 : index
    %140 = vector.load %arg10[%c0_51, %c0_52] : memref<8x16xf32, #tpu.memory_space<vmem>>, vector<8x16xf32>
    tpu.vector_store %arg10[%c0_51, %c0_52], %135 {strides = array<i32>} : memref<8x16xf32, #tpu.memory_space<vmem>>, vector<8x16xf32>,
    %141 = tpu.concatenate %94, %109, %124, %139 in 1 : vector<8x16xf32>, vector<8x16xf32>, vector<8x16xf32>, vector<8x16xf32> -> vector<8x64xf32>
    %c0_53 = arith.constant 0 : index
    %c0_54 = arith.constant 0 : index
    %c0_55 = arith.constant 0 : index
    %142 = vector.load %arg7[%c0_53, %c0_54, %c0_55] : memref<1x8x64xf32, #tpu.memory_space<vmem>>, vector<1x8x64xf32>
    %143 = vector.shape_cast %142 : vector<1x8x64xf32> to vector<8x64xf32>
    %144 = vector.shape_cast %141 : vector<8x64xf32> to vector<1x8x64xf32>
    tpu.vector_store %arg7[%c0_53, %c0_54, %c0_55], %144 {strides = array<i32>} : memref<1x8x64xf32, #tpu.memory_space<vmem>>, vector<1x8x64xf32>,
    %145 = tpu.concatenate %90, %105, %120, %135 in 1 : vector<8x16xf32>, vector<8x16xf32>, vector<8x16xf32>, vector<8x16xf32> -> vector<8x64xf32>
    %c0_56 = arith.constant 0 : index
    %c0_57 = arith.constant 0 : index
    %c0_58 = arith.constant 0 : index
    %146 = vector.load %arg8[%c0_56, %c0_57, %c0_58] : memref<1x8x64xf32, #tpu.memory_space<vmem>>, vector<1x8x64xf32>
    %147 = vector.shape_cast %146 : vector<1x8x64xf32> to vector<8x64xf32>
    %148 = vector.shape_cast %145 : vector<8x64xf32> to vector<1x8x64xf32>
    tpu.vector_store %arg8[%c0_56, %c0_57, %c0_58], %148 {strides = array<i32>} : memref<1x8x64xf32, #tpu.memory_space<vmem>>, vector<1x8x64xf32>,
    return
  }
  func.func @transform_0(%arg0: i32, %arg1: i32) -> (i32, i32, i32, i32) {
    %c0_i32 = arith.constant 0 : i32
    %c0_i32_0 = arith.constant 0 : i32
    %c0_i32_1 = arith.constant 0 : i32
    return %arg1, %c0_i32, %arg0, %c0_i32_0 : i32, i32, i32, i32
  }
  func.func @transform_1(%arg0: i32, %arg1: i32) -> (i32, i32) {
    %c0_i32 = arith.constant 0 : i32
    %c0_i32_0 = arith.constant 0 : i32
    %c0_i32_1 = arith.constant 0 : i32
    return %c0_i32, %c0_i32_0 : i32, i32
  }
  func.func @transform_2(%arg0: i32, %arg1: i32) -> (i32, i32) {
    %c0_i32 = arith.constant 0 : i32
    %c0_i32_0 = arith.constant 0 : i32
    %c0_i32_1 = arith.constant 0 : i32
    return %c0_i32, %c0_i32_0 : i32, i32
  }
  func.func @transform_3(%arg0: i32, %arg1: i32) -> (i32, i32) {
    %c0_i32 = arith.constant 0 : i32
    %c0_i32_0 = arith.constant 0 : i32
    %c0_i32_1 = arith.constant 0 : i32
    return %c0_i32, %c0_i32_0 : i32, i32
  }
  func.func @transform_4(%arg0: i32, %arg1: i32) -> (i32, i32) {
    %c0_i32 = arith.constant 0 : i32
    %c0_i32_0 = arith.constant 0 : i32
    %c0_i32_1 = arith.constant 0 : i32
    return %c0_i32, %c0_i32_0 : i32, i32
  }
  func.func @transform_5(%arg0: i32, %arg1: i32) -> (i32, i32, i32) {
    %c0_i32 = arith.constant 0 : i32
    %c0_i32_0 = arith.constant 0 : i32
    return %arg1, %arg0, %c0_i32 : i32, i32, i32
  }
  func.func @transform_6(%arg0: i32, %arg1: i32) -> (i32, i32, i32) {
    %c0_i32 = arith.constant 0 : i32
    %c0_i32_0 = arith.constant 0 : i32
    return %arg1, %arg0, %c0_i32 : i32, i32, i32
  }
}

</mosaic_0001>

<llo_original>
// kernel: tpu_custom_call.1
$region0: #{tpu_custom_call.1}
  #allocation0 [shape = 'u32[]', space=smem, size = 0x4, offset = 0x4, fixed_abs, tag = 'smem constant byte address 0x4 - core index']
  #allocation1 [shape = 'u32[144,128]{1,0:T(1,128)}', space=vmem, size = 0x12000, scoped, tag = 'internal scratch']
  #allocation2 [shape = 'f32[8,64]{1,0:T(8,128)}', space=vmem, size = 0x1000, scoped, tag = 'scratch operand']
  #allocation3 [shape = 'f32[8,16]{1,0:T(8,128)}', space=vmem, size = 0x1000, scoped, tag = 'scratch operand']
  %s0 = inlined_call_operand.vmem [shape: f32[2,4,8,32], index: 0, kind: input, shape index: {}]
  %s1 = inlined_call_operand.hbm [shape: f32[32,64], index: 1, kind: input, shape index: {}]
  %s2 = inlined_call_operand.vmem [shape: f32[1,64], index: 2, kind: input, shape index: {}]
  %s3 = inlined_call_operand.vmem [shape: f32[64,16], index: 3, kind: input, shape index: {}]
  %s4 = inlined_call_operand.vmem [shape: f32[1,16], index: 4, kind: input, shape index: {}]
  %s5 = inlined_call_operand.hbm [shape: f32[2,8,64], index: 5, kind: output, shape index: {0}]
  %s6 = inlined_call_operand.hbm [shape: f32[2,8,64], index: 6, kind: output, shape index: {1}]
  %7 = xla_tuple %s5, %s6
  %s8 = sld [smem:[#allocation0]]
  $region69: #{tpu_custom_call.1} parent=0
    _
  %s10 = ssub.s32 1, %s8
  %s11 = scalar_select 0, %s10, %s8
  $region1: #{tpu_custom_call.1} parent=0
    #allocation4 [shape = 'u8[16384]{0}', space=vmem, size = 0x4000, scoped, tag = 'input window, operand 1, single buffered']
    #allocation5 [shape = 's32[2]{0}', space=sflag, size = 0x8, scoped, tag = 'scoped memory for tpu_custom_call.1']
    #allocation6 [shape = 's32[2]{0}', space=sflag, size = 0x8, scoped, tag = 'scoped memory for tpu_custom_call.1']
    #allocation7 [shape = 'u8[8192]{0}', space=vmem, size = 0x2000, scoped, tag = 'output window, operand 0']
    #allocation8 [shape = 'u8[8192]{0}', space=vmem, size = 0x2000, scoped, tag = 'output window, operand 1']
    #allocation9 [shape = 's32[2]{0}', space=sflag, size = 0x8, scoped, tag = 'scoped memory for tpu_custom_call.1']
    %12 = vsyncpa [#allocation5], 0
    %13 = vsyncpa [#allocation6], 0
    %s14 = scalar_lea.sflag [#allocation6], 1
    %15 = vsyncpa %s14, 0
    %16 = vsyncpa [#allocation9], 0
    %s17 = scalar_lea.sflag [#allocation9], 1
    %18 = vsyncpa %s17, 0
    loop: start=0, step=1, limit=4
    $region2: #{tpu_custom_call.1} parent=1 // loop_pre_header
      _
    $region3: #{tpu_custom_call.1} parent=1 // loop_header
      %s20 = sphi 0, %s24
      %p21 = scmp.ge.s32.totalorder %s20, 4
      %s27 = sphi 0, %s39
      %s28 = sphi 0, %s35
      %s29 = sphi 0, %s27
      %s30 = sphi 0, %s28
      %s31 = sphi 0, %s29
      %s32 = sphi 0, %s30
      %s44 = sphi 0, %s46
      %s47 = sphi 0, %s44
      %s48 = sphi 0, %s47
      %s64 = sphi 0, %s48
      %s68 = sphi 0, %s68
      %s70 = sphi 0, %s68
      %s71 = sphi 0, %s70
      %s85 = sphi 0, %s71
      %s89 = sphi 0, %s89
      %s91 = sphi 0, %s89
      %s92 = sphi 0, %s91
      %s106 = sphi 0, %s92
      %s110 = sphi 0, %s110
      %s112 = sphi 0, %s110
      %s113 = sphi 0, %s112
      %s127 = sphi 0, %s113
      %s131 = sphi 0, %s131
      %s133 = sphi 0, %s131
      %s134 = sphi 0, %s133
      %s148 = sphi 0, %s134
      %s156 = sphi 0, %s158
      %s159 = sphi 0, %s156
      %s160 = sphi 0, %s159
      %s176 = sphi 0, %s160
      %s184 = sphi 0, %s186
      %s187 = sphi 0, %s184
      %s188 = sphi 0, %s187
      %s204 = sphi 0, %s188
    $region4: #{tpu_custom_call.1} parent=1 // loop_header_branch
      %23 = sbr.rel (%p21) target = $region8
    $region5: #{tpu_custom_call.1} parent=1 // loop_body
      %s25 = ssub.s32 %s20, 1
      %s26 = ssub.s32 %s20, 2
      %s33 = sadd.s32 1, %s28
      %p34 = scmp.ge.s32.totalorder %s33, 2
      %s35 = scalar_select %p34, 0, %s33
      %s36 = sadd.s32 1, %s27
      %s37 = scalar_select %p34, %s36, %s27
      %p38 = scmp.ge.s32.totalorder %s37, 1
      %s39 = scalar_select %p38, 0, %s37
      %s40 = ssub.s32 %s28, %s35
      %s41 = ssub.s32 %s27, %s39
      %s42 = sor.u32 %s40, %s41
      %p43 = scmp.eq.s32.totalorder %s42, 0
      %s45 = sadd.s32 %s44, 1
      %s46 = scalar_select %p43, %s44, %s45
      %p49 = pneg %p43
      %p50 = scmp.eq.s32.totalorder %s20, 1
      %p51 = por %p49, %p50
      %p52 = scmp.ne.s32.totalorder %s44, %s47
      %p53 = scmp.eq.s32.totalorder %s20, 0
      %p54 = por %p52, %p53
      %p55 = scmp.ne.s32.totalorder %s44, %s47
      %p56 = scmp.eq.s32.totalorder %s25, 1
      %p57 = por %p55, %p56
      %p58 = scmp.ne.s32.totalorder %s47, %s48
      %p59 = scmp.eq.s32.totalorder %s25, 0
      %p60 = por %p58, %p59
      %p61 = scmp.ne.s32.totalorder %s47, %s48
      %p62 = scmp.eq.s32.totalorder %s26, 1
      %p63 = por %p61, %p62
      %p65 = scmp.ne.s32.totalorder %s48, %s64
      %p66 = scmp.eq.s32.totalorder %s26, 0
      %p67 = por %p65, %p66
      %s69 = sadd.s32 %s68, 1
      %p72 = scmp.eq.s32.totalorder %s20, 1
      %p73 = scmp.ne.s32.totalorder %s68, %s70
      %p74 = scmp.eq.s32.totalorder %s20, 0
      %p75 = por %p73, %p74
      %p76 = scmp.ne.s32.totalorder %s68, %s70
      %p77 = scmp.eq.s32.totalorder %s25, 1
      %p78 = por %p76, %p77
      %p79 = scmp.ne.s32.totalorder %s70, %s71
      %p80 = scmp.eq.s32.totalorder %s25, 0
      %p81 = por %p79, %p80
      %p82 = scmp.ne.s32.totalorder %s70, %s71
      %p83 = scmp.eq.s32.totalorder %s26, 1
      %p84 = por %p82, %p83
      %p86 = scmp.ne.s32.totalorder %s71, %s85
      %p87 = scmp.eq.s32.totalorder %s26, 0
      %p88 = por %p86, %p87
      %s90 = sadd.s32 %s89, 1
      %p93 = scmp.eq.s32.totalorder %s20, 1
      %p94 = scmp.ne.s32.totalorder %s89, %s91
      %p95 = scmp.eq.s32.totalorder %s20, 0
      %p96 = por %p94, %p95
      %p97 = scmp.ne.s32.totalorder %s89, %s91
      %p98 = scmp.eq.s32.totalorder %s25, 1
      %p99 = por %p97, %p98
      %p100 = scmp.ne.s32.totalorder %s91, %s92
      %p101 = scmp.eq.s32.totalorder %s25, 0
      %p102 = por %p100, %p101
      %p103 = scmp.ne.s32.totalorder %s91, %s92
      %p104 = scmp.eq.s32.totalorder %s26, 1
      %p105 = por %p103, %p104
      %p107 = scmp.ne.s32.totalorder %s92, %s106
      %p108 = scmp.eq.s32.totalorder %s26, 0
      %p109 = por %p107, %p108
      %s111 = sadd.s32 %s110, 1
      %p114 = scmp.eq.s32.totalorder %s20, 1
      %p115 = scmp.ne.s32.totalorder %s110, %s112
      %p116 = scmp.eq.s32.totalorder %s20, 0
      %p117 = por %p115, %p116
      %p118 = scmp.ne.s32.totalorder %s110, %s112
      %p119 = scmp.eq.s32.totalorder %s25, 1
      %p120 = por %p118, %p119
      %p121 = scmp.ne.s32.totalorder %s112, %s113
      %p122 = scmp.eq.s32.totalorder %s25, 0
      %p123 = por %p121, %p122
      %p124 = scmp.ne.s32.totalorder %s112, %s113
      %p125 = scmp.eq.s32.totalorder %s26, 1
      %p126 = por %p124, %p125
      %p128 = scmp.ne.s32.totalorder %s113, %s127
      %p129 = scmp.eq.s32.totalorder %s26, 0
      %p130 = por %p128, %p129
      %s132 = sadd.s32 %s131, 1
      %p135 = scmp.eq.s32.totalorder %s20, 1
      %p136 = scmp.ne.s32.totalorder %s131, %s133
      %p137 = scmp.eq.s32.totalorder %s20, 0
      %p138 = por %p136, %p137
      %p139 = scmp.ne.s32.totalorder %s131, %s133
      %p140 = scmp.eq.s32.totalorder %s25, 1
      %p141 = por %p139, %p140
      %p142 = scmp.ne.s32.totalorder %s133, %s134
      %p143 = scmp.eq.s32.totalorder %s25, 0
      %p144 = por %p142, %p143
      %p145 = scmp.ne.s32.totalorder %s133, %s134
      %p146 = scmp.eq.s32.totalorder %s26, 1
      %p147 = por %p145, %p146
      %p149 = scmp.ne.s32.totalorder %s134, %s148
      %p150 = scmp.eq.s32.totalorder %s26, 0
      %p151 = por %p149, %p150
      %s152 = ssub.s32 %s28, %s35
      %s153 = ssub.s32 %s27, %s39
      %s154 = sor.u32 %s152, %s153
      %p155 = scmp.eq.s32.totalorder %s154, 0
      %s157 = sadd.s32 %s156, 1
      %s158 = scalar_select %p155, %s156, %s157
      %p161 = pneg %p155
      %p162 = scmp.eq.s32.totalorder %s20, 1
      %p163 = por %p161, %p162
      %p164 = scmp.ne.s32.totalorder %s156, %s159
      %p165 = scmp.eq.s32.totalorder %s20, 0
      %p166 = por %p164, %p165
      %p167 = scmp.ne.s32.totalorder %s156, %s159
      %p168 = scmp.eq.s32.totalorder %s25, 1
      %p169 = por %p167, %p168
      %p170 = scmp.ne.s32.totalorder %s159, %s160
      %p171 = scmp.eq.s32.totalorder %s25, 0
      %p172 = por %p170, %p171
      %p173 = scmp.ne.s32.totalorder %s159, %s160
      %p174 = scmp.eq.s32.totalorder %s26, 1
      %p175 = por %p173, %p174
      %p177 = scmp.ne.s32.totalorder %s160, %s176
      %p178 = scmp.eq.s32.totalorder %s26, 0
      %p179 = por %p177, %p178
      %s180 = ssub.s32 %s28, %s35
      %s181 = ssub.s32 %s27, %s39
      %s182 = sor.u32 %s180, %s181
      %p183 = scmp.eq.s32.totalorder %s182, 0
      %s185 = sadd.s32 %s184, 1
      %s186 = scalar_select %p183, %s184, %s185
      %p189 = pneg %p183
      %p190 = scmp.eq.s32.totalorder %s20, 1
      %p191 = por %p189, %p190
      %p192 = scmp.ne.s32.totalorder %s184, %s187
      %p193 = scmp.eq.s32.totalorder %s20, 0
      %p194 = por %p192, %p193
      %p195 = scmp.ne.s32.totalorder %s184, %s187
      %p196 = scmp.eq.s32.totalorder %s25, 1
      %p197 = por %p195, %p196
      %p198 = scmp.ne.s32.totalorder %s187, %s188
      %p199 = scmp.eq.s32.totalorder %s25, 0
      %p200 = por %p198, %p199
      %p201 = scmp.ne.s32.totalorder %s187, %s188
      %p202 = scmp.eq.s32.totalorder %s26, 1
      %p203 = por %p201, %p202
      %p205 = scmp.ne.s32.totalorder %s188, %s204
      %p206 = scmp.eq.s32.totalorder %s26, 0
      %p207 = por %p205, %p206
      %p208 = scmp.le.s32.totalorder 1, %s20
      %p209 = scmp.lt.s32.totalorder %s20, 3
      %p210 = pnand %p208, %p209
      %p211 = pneg %p210
      // Predicated region
      $region9: #{tpu_custom_call.1} parent=5 // pred_check
        _
      $region10: #{tpu_custom_call.1} parent=5 // pred_check_branch
        %213 = sbr.rel (%p210) target = $region12
      $region11: #{tpu_custom_call.1} parent=5 // pred_region
        %s214 = ssub.s32 %s20, 1
        // Predicated region
        $region13: #{tpu_custom_call.1} parent=11 // pred_check
          %p215 = pneg %p81
        $region14: #{tpu_custom_call.1} parent=11 // pred_check_branch
          %217 = sbr.rel (%p215) target = $region16
        $region15: #{tpu_custom_call.1} parent=11 // pred_region
          %s219 = ssub.s32 512, 512
          %220 = vsyncadd [#allocation5], %s219
          %s221 = sshll.u32 [#allocation4], 4
          %s222 = int_to_ptr.vmem [resolvable:$true] %s221
          %227 = dma.hbm_to_vmem [thread:$0]  %s1, 512, %s222, [#allocation5], 128, 128, 8
        $region16: #{tpu_custom_call.1} parent=11 // pred_fallthru
          _
        // Predicated region
        $region17: #{tpu_custom_call.1} parent=11 // pred_check
          %p228 = pneg %p102
        $region18: #{tpu_custom_call.1} parent=11 // pred_check_branch
          %230 = sbr.rel (%p228) target = $region20
        $region19: #{tpu_custom_call.1} parent=11 // pred_region
          _
        $region20: #{tpu_custom_call.1} parent=11 // pred_fallthru
          _
        // Predicated region
        $region21: #{tpu_custom_call.1} parent=11 // pred_check
          %p231 = pneg %p123
        $region22: #{tpu_custom_call.1} parent=11 // pred_check_branch
          %233 = sbr.rel (%p231) target = $region24
        $region23: #{tpu_custom_call.1} parent=11 // pred_region
          _
        $region24: #{tpu_custom_call.1} parent=11 // pred_fallthru
          _
        // Predicated region
        $region25: #{tpu_custom_call.1} parent=11 // pred_check
          %p234 = pneg %p144
        $region26: #{tpu_custom_call.1} parent=11 // pred_check_branch
          %236 = sbr.rel (%p234) target = $region28
        $region27: #{tpu_custom_call.1} parent=11 // pred_region
          _
        $region28: #{tpu_custom_call.1} parent=11 // pred_fallthru
          _
      $region12: #{tpu_custom_call.1} parent=5 // pred_fallthru
        _
      %p237 = scmp.lt.s32.totalorder %s20, 2
      // Predicated region
      $region29: #{tpu_custom_call.1} parent=5 // pred_check
        %p238 = pneg %p237
      $region30: #{tpu_custom_call.1} parent=5 // pred_check_branch
        %240 = sbr.rel (%p238) target = $region32
      $region31: #{tpu_custom_call.1} parent=5 // pred_region
        // Predicated region
        $region33: #{tpu_custom_call.1} parent=31 // pred_check
          %p241 = pneg %p54
        $region34: #{tpu_custom_call.1} parent=31 // pred_check_branch
          %243 = sbr.rel (%p241) target = $region36
        $region35: #{tpu_custom_call.1} parent=31 // pred_region
          %p244 = scmp.lt.s32.totalorder %s28, 1
          %s245 = scalar_select %p244, %s28, 1
          %p246 = scmp.lt.s32.totalorder %s27, 0
          %s247 = scalar_select %p246, %s27, 0
          %s248 = smul.addr %s245, 4
          %s249 = sadd.s32 %s247, %s248
          %s250 = smul.addr %s249, 8
          %s251 = scalar_lea.vmem %s0, %s250
        $region36: #{tpu_custom_call.1} parent=31 // pred_fallthru
          _
      $region32: #{tpu_custom_call.1} parent=5 // pred_fallthru
        _
      %p252 = scmp.le.s32.totalorder 1, %s20
      %p253 = scmp.lt.s32.totalorder %s20, 3
      %p254 = pnand %p252, %p253
      %p255 = pneg %p254
      // Predicated region
      $region37: #{tpu_custom_call.1} parent=5 // pred_check
        _
      $region38: #{tpu_custom_call.1} parent=5 // pred_check_branch
        %257 = sbr.rel (%p254) target = $region40
      $region39: #{tpu_custom_call.1} parent=5 // pred_region
        %s258 = ssub.s32 %s20, 1
        // Predicated region
        $region41: #{tpu_custom_call.1} parent=39 // pred_check
          %p259 = pneg %p81
        $region42: #{tpu_custom_call.1} parent=39 // pred_check_branch
          %261 = sbr.rel (%p259) target = $region44
        $region43: #{tpu_custom_call.1} parent=39 // pred_region
          %262 = dma.done [#allocation5], 512
        $region44: #{tpu_custom_call.1} parent=39 // pred_fallthru
          _
        %p263 = scmp.lt.s32.totalorder %s30, 1
        %s264 = scalar_select %p263, %s30, 1
        %p265 = scmp.lt.s32.totalorder %s29, 0
        %s266 = scalar_select %p265, %s29, 0
        %s267 = smul.addr %s264, 4
        %s268 = sadd.s32 %s266, %s267
        %s269 = smul.addr %s268, 8
        %s270 = scalar_lea.vmem %s0, %s269
        %p271 = pneg %p60
        %p272 = pneg %p57
        %p273 = pneg %p81
        %p274 = pneg %p78
        %p275 = pneg %p102
        %p276 = pneg %p99
        %p277 = pneg %p123
        %p278 = pneg %p120
        %p279 = pneg %p144
        %p280 = pneg %p141
        %p281 = pneg %p172
        %p282 = pneg %p169
        %s283 = sand.u32 %s159, 1
        %s284 = scalar_lea.sflag [#allocation6], %s283
        %s285 = sand.u32 %s159, 1
        %s286 = smul.addr %s285, 8
        %s287 = scalar_lea.vmem [#allocation7], %s286
        %p288 = pneg %p200
        %p289 = pneg %p197
        %s290 = sand.u32 %s187, 1
        %s291 = scalar_lea.sflag [#allocation9], %s290
        %s292 = sand.u32 %s187, 1
        %s293 = smul.addr %s292, 8
        %s294 = scalar_lea.vmem [#allocation8], %s293
        %p295 = scmp.lt.s32.totalorder %s30, 1
        %s296 = scalar_select %p295, %s30, 1
        %p297 = scmp.lt.s32.totalorder %s29, 0
        %s298 = scalar_select %p297, %s29, 0
        %s299 = smul.addr %s296, 4
        %s300 = sadd.s32 %s298, %s299
        %s301 = smul.addr %s300, 8
        %s302 = scalar_lea.vmem %s0, %s301
        %p303 = scmp.eq.s32.totalorder %s30, 0
        // Predicated region
        $region45: #{tpu_custom_call.1} parent=39 // pred_check
          %p304 = pneg %p303
        $region46: #{tpu_custom_call.1} parent=39 // pred_check_branch
          %306 = sbr.rel (%p304) target = $region48
        $region47: #{tpu_custom_call.1} parent=39 // pred_region
          %vm307 = vcmask 523264
          %308 = vst.msk [vmem:[#allocation2] sm:$0xff] %vm307, 0.0
          %vm309 = vcmask 130048
          %310 = vst.msk [vmem:[#allocation3] sm:$0xff] %vm309, 0.0
        $region48: #{tpu_custom_call.1} parent=39 // pred_fallthru
          _
        %v311 = vld [vmem:[#allocation4] sm:$0xff]
        %v312 = vld [vmem:[#allocation4 + $0x8] sm:$0xff]
        %v313 = vld [vmem:[#allocation4 + $0x10] sm:$0xff]
        %v314 = vld [vmem:[#allocation4 + $0x18] sm:$0xff]
        %v315 = vld [vmem:[%s3] sm:$0xff]
        %v316 = vld [vmem:[%s3 + $0x8] sm:$0xff]
        %v317 = vld [vmem:[%s3 + $0x10] sm:$0xff]
        %v318 = vld [vmem:[%s3 + $0x18] sm:$0xff]
        %v319 = vld [vmem:[%s3 + $0x20] sm:$0xff]
        %v320 = vld [vmem:[%s3 + $0x28] sm:$0xff]
        %v321 = vld [vmem:[%s3 + $0x30] sm:$0xff]
        %v322 = vld [vmem:[%s3 + $0x38] sm:$0xff]
        %v323 = vld [vmem:[%s2] sm:$0x1]
        %v324 = vld [vmem:[%s4] sm:$0x1]
        %v325 = vld [vmem:[%s302] sm:$0xff]
        %v326 = vld [vmem:[%s302 + $0x8] sm:$0xff]
        %v327 = vld [vmem:[%s302 + $0x10] sm:$0xff]
        %v328 = vld [vmem:[%s302 + $0x18] sm:$0xff]
        %v330 = vlaneseq
        %v331 = vshrl.u32 %v330, 7
        %v332 = vsub.s32 0, %v331
        %v333 = vrot.slane %v323, %v332
        %vm335 = vcmask 261120
        %v337 = vsel %vm335, %v325, 0
        %v340 = vsel %vm335, %v326, 0
        %v343 = vsel %vm335, %v327, 0
        %v346 = vsel %vm335, %v328, 0
        %348 = vmatprep.subr.mxu0 0.0
        %349 = vmatpush1.msra.mxu0 0.0
        %350 = vmatprep.subr.mxu0 0.0
        %351 = vmatpush1.msra.mxu0 0.0
        %352 = vmatprep.subr.mxu0 0.0
        %353 = vmatpush1.msra.mxu0 0.0
        %354 = vmatprep.subr.mxu0 0.0
        %355 = vmatpush1.msra.mxu0 0.0
        %356 = vmatprep.subr.mxu0 0.0
        %357 = vmatpush1.msra.mxu0 0.0
        %358 = vmatprep.subr.mxu0 0.0
        %359 = vmatpush1.msra.mxu0 0.0
        %360 = vmatprep.subr.mxu0 0.0
        %361 = vmatpush1.msra.mxu0 0.0
        %362 = vmatprep.subr.mxu0 0.0
        %363 = vmatpush1.msra.mxu0 0.0
        %364 = vmatprep.subr.mxu0 0.0
        %365 = vmatpush1.msra.mxu0 0.0
        %366 = vmatprep.subr.mxu0 0.0
        %367 = vmatpush1.msra.mxu0 0.0
        %368 = vmatprep.subr.mxu0 0.0
        %369 = vmatpush1.msra.mxu0 0.0
        %370 = vmatprep.subr.mxu0 0.0
        %371 = vmatpush1.msra.mxu0 0.0
        %372 = vmatprep.subr.mxu0 0.0
        %373 = vmatpush1.msra.mxu0 %v314
        %374 = vmatprep.subr.mxu0 0.0
        %375 = vmatpush1.msra.mxu0 %v313
        %376 = vmatprep.subr.mxu0 0.0
        %377 = vmatpush1.msra.mxu0 %v312
        %378 = vmatprep.subr.mxu0 0.0
        %379 = vmatpush1.msra.mxu0 %v311
        %380 = vmatprep.subr.mxu0 0.0
        %381 = vmatpush2.msra.mxu0 0.0
        %382 = vmatprep.subr.mxu0 0.0
        %383 = vmatpush2.msra.mxu0 0.0
        %384 = vmatprep.subr.mxu0 0.0
        %385 = vmatpush2.msra.mxu0 0.0
        %386 = vmatprep.subr.mxu0 0.0
        %387 = vmatpush2.msra.mxu0 0.0
        %388 = vmatprep.subr.mxu0 0.0
        %389 = vmatpush2.msra.mxu0 0.0
        %390 = vmatprep.subr.mxu0 0.0
        %391 = vmatpush2.msra.mxu0 0.0
        %392 = vmatprep.subr.mxu0 0.0
        %393 = vmatpush2.msra.mxu0 0.0
        %394 = vmatprep.subr.mxu0 0.0
        %395 = vmatpush2.msra.mxu0 0.0
        %396 = vmatprep.subr.mxu0 0.0
        %397 = vmatpush2.msra.mxu0 0.0
        %398 = vmatprep.subr.mxu0 0.0
        %399 = vmatpush2.msra.mxu0 0.0
        %400 = vmatprep.subr.mxu0 0.0
        %401 = vmatpush2.msra.mxu0 0.0
        %402 = vmatprep.subr.mxu0 0.0
        %403 = vmatpush2.msra.mxu0 0.0
        %404 = vmatprep.subr.mxu0 0.0
        %405 = vmatpush2.msra.mxu0 0.0
        %406 = vmatprep.subr.mxu0 0.0
        %407 = vmatpush2.msra.mxu0 0.0
        %408 = vmatprep.subr.mxu0 0.0
        %409 = vmatpush2.msra.mxu0 0.0
        %410 = vmatprep.subr.mxu0 0.0
        %411 = vmatpush2.msra.mxu0 0.0
        %412 = vmatprep.mubr.f32.mxu0 0.0
        %413 = vmatmul.mubr.f32.gmra.mxu0 %v337
        %v414 = vpop.f32.mrf.mxu0
        %v415 = vadd.f32 %v333, %v414
        %v416 = vpop.f32.mrf.mxu0
        %417 = vmatprep.mubr.f32.mxu0 0.0
        %418 = vmatmul.mubr.f32.gmra.mxu0 %v340
        %v419 = vpop.f32.mrf.mxu0
        %v420 = vadd.f32 %v333, %v419
        %v421 = vpop.f32.mrf.mxu0
        %422 = vmatprep.mubr.f32.mxu0 0.0
        %423 = vmatmul.mubr.f32.gmra.mxu0 %v343
        %v424 = vpop.f32.mrf.mxu0
        %v425 = vadd.f32 %v333, %v424
        %v426 = vpop.f32.mrf.mxu0
        %427 = vmatprep.mubr.f32.mxu0 0.0
        %428 = vmatmul.mubr.f32.gmra.mxu0 %v346
        %v429 = vpop.f32.mrf.mxu0
        %v430 = vadd.f32 %v333, %v429
        %v431 = vpop.f32.mrf.mxu0
        %432 = vdwg.mxu0
        %v433 = vld [vmem:[#allocation2] sm:$0xff]
        %vm434 = vcmp.gt.f32.partialorder %v433, 1.0
        %v435 = vsel %vm434, 1, 0
        %v436 = vcvt.s32.f32 %v435
        %v437 = vmul.f32 %v433, 0.9
        %v438 = vadd.f32 %v437, %v415
        %v439 = vsub.f32 %v438, %v436
        %vm440 = vcmp.gt.f32.partialorder %v439, 1.0
        %v441 = vsel %vm440, 1, 0
        %v442 = vcvt.s32.f32 %v441
        %v443 = vmul.f32 %v439, 0.9
        %v444 = vadd.f32 %v443, %v420
        %v445 = vsub.f32 %v444, %v442
        %vm446 = vcmp.gt.f32.partialorder %v445, 1.0
        %v447 = vsel %vm446, 1, 0
        %v448 = vcvt.s32.f32 %v447
        %v449 = vmul.f32 %v445, 0.9
        %v450 = vadd.f32 %v449, %v425
        %v451 = vsub.f32 %v450, %v448
        %vm452 = vcmp.gt.f32.partialorder %v451, 1.0
        %v453 = vsel %vm452, 1, 0
        %v454 = vcvt.s32.f32 %v453
        %v455 = vmul.f32 %v451, 0.9
        %v456 = vadd.f32 %v455, %v430
        %v457 = vsub.f32 %v456, %v454
        %vm458 = vcmp.gt.f32.partialorder %v457, 1.0
        %v459 = vsel %vm458, 1, 0
        %v460 = vcvt.s32.f32 %v459
        %vm461 = vcmask 523264
        %462 = vst.msk [vmem:[#allocation2] sm:$0xff] %vm461, %v457
        %v464 = vlaneseq
        %v465 = vshrl.u32 %v464, 7
        %v466 = vsub.s32 0, %v465
        %v467 = vrot.slane %v324, %v466
        %v470 = vsel %vm461, %v442, 0
        %v473 = vsel %vm461, %v448, 0
        %v476 = vsel %vm461, %v454, 0
        %v479 = vsel %vm461, %v460, 0
        %481 = vmatprep.subr.mxu0 0.0
        %482 = vmatpush1.msra.mxu0 0.0
        %483 = vmatprep.subr.mxu0 0.0
        %484 = vmatpush1.msra.mxu0 0.0
        %485 = vmatprep.subr.mxu0 0.0
        %486 = vmatpush1.msra.mxu0 0.0
        %487 = vmatprep.subr.mxu0 0.0
        %488 = vmatpush1.msra.mxu0 0.0
        %489 = vmatprep.subr.mxu0 0.0
        %490 = vmatpush1.msra.mxu0 0.0
        %491 = vmatprep.subr.mxu0 0.0
        %492 = vmatpush1.msra.mxu0 0.0
        %493 = vmatprep.subr.mxu0 0.0
        %494 = vmatpush1.msra.mxu0 0.0
        %495 = vmatprep.subr.mxu0 0.0
        %496 = vmatpush1.msra.mxu0 0.0
        %497 = vmatprep.subr.mxu0 0.0
        %498 = vmatpush1.msra.mxu0 %v322
        %499 = vmatprep.subr.mxu0 0.0
        %500 = vmatpush1.msra.mxu0 %v321
        %501 = vmatprep.subr.mxu0 0.0
        %502 = vmatpush1.msra.mxu0 %v320
        %503 = vmatprep.subr.mxu0 0.0
        %504 = vmatpush1.msra.mxu0 %v319
        %505 = vmatprep.subr.mxu0 0.0
        %506 = vmatpush1.msra.mxu0 %v318
        %507 = vmatprep.subr.mxu0 0.0
        %508 = vmatpush1.msra.mxu0 %v317
        %509 = vmatprep.subr.mxu0 0.0
        %510 = vmatpush1.msra.mxu0 %v316
        %511 = vmatprep.subr.mxu0 0.0
        %512 = vmatpush1.msra.mxu0 %v315
        %513 = vmatprep.subr.mxu0 0.0
        %514 = vmatpush2.msra.mxu0 0.0
        %515 = vmatprep.subr.mxu0 0.0
        %516 = vmatpush2.msra.mxu0 0.0
        %517 = vmatprep.subr.mxu0 0.0
        %518 = vmatpush2.msra.mxu0 0.0
        %519 = vmatprep.subr.mxu0 0.0
        %520 = vmatpush2.msra.mxu0 0.0
        %521 = vmatprep.subr.mxu0 0.0
        %522 = vmatpush2.msra.mxu0 0.0
        %523 = vmatprep.subr.mxu0 0.0
        %524 = vmatpush2.msra.mxu0 0.0
        %525 = vmatprep.subr.mxu0 0.0
        %526 = vmatpush2.msra.mxu0 0.0
        %527 = vmatprep.subr.mxu0 0.0
        %528 = vmatpush2.msra.mxu0 0.0
        %529 = vmatprep.subr.mxu0 0.0
        %530 = vmatpush2.msra.mxu0 0.0
        %531 = vmatprep.subr.mxu0 0.0
        %532 = vmatpush2.msra.mxu0 0.0
        %533 = vmatprep.subr.mxu0 0.0
        %534 = vmatpush2.msra.mxu0 0.0
        %535 = vmatprep.subr.mxu0 0.0
        %536 = vmatpush2.msra.mxu0 0.0
        %537 = vmatprep.subr.mxu0 0.0
        %538 = vmatpush2.msra.mxu0 0.0
        %539 = vmatprep.subr.mxu0 0.0
        %540 = vmatpush2.msra.mxu0 0.0
        %541 = vmatprep.subr.mxu0 0.0
        %542 = vmatpush2.msra.mxu0 0.0
        %543 = vmatprep.subr.mxu0 0.0
        %544 = vmatpush2.msra.mxu0 0.0
        %545 = vmatprep.mubr.f32.mxu0 0.0
        %546 = vmatmul.mubr.f32.gmra.mxu0 %v470
        %v547 = vpop.f32.mrf.mxu0
        %v548 = vadd.f32 %v467, %v547
        %v549 = vpop.f32.mrf.mxu0
        %550 = vmatprep.mubr.f32.mxu0 0.0
        %551 = vmatmul.mubr.f32.gmra.mxu0 %v473
        %v552 = vpop.f32.mrf.mxu0
        %v553 = vadd.f32 %v467, %v552
        %v554 = vpop.f32.mrf.mxu0
        %555 = vmatprep.mubr.f32.mxu0 0.0
        %556 = vmatmul.mubr.f32.gmra.mxu0 %v476
        %v557 = vpop.f32.mrf.mxu0
        %v558 = vadd.f32 %v467, %v557
        %v559 = vpop.f32.mrf.mxu0
        %560 = vmatprep.mubr.f32.mxu0 0.0
        %561 = vmatmul.mubr.f32.gmra.mxu0 %v479
        %v562 = vpop.f32.mrf.mxu0
        %v563 = vadd.f32 %v467, %v562
        %v564 = vpop.f32.mrf.mxu0
        %565 = vdwg.mxu0
        %v566 = vld [vmem:[#allocation3] sm:$0xff]
        %vm567 = vcmp.gt.f32.partialorder %v566, 1.0
        %v568 = vsel %vm567, 1, 0
        %v569 = vcvt.s32.f32 %v568
        %v570 = vmul.f32 %v566, 0.9
        %v571 = vadd.f32 %v570, %v548
        %v572 = vsub.f32 %v571, %v569
        %vm573 = vcmp.gt.f32.partialorder %v572, 1.0
        %v574 = vsel %vm573, 1, 0
        %v575 = vcvt.s32.f32 %v574
        %v576 = vmul.f32 %v572, 0.9
        %v577 = vadd.f32 %v576, %v553
        %v578 = vsub.f32 %v577, %v575
        %vm579 = vcmp.gt.f32.partialorder %v578, 1.0
        %v580 = vsel %vm579, 1, 0
        %v581 = vcvt.s32.f32 %v580
        %v582 = vmul.f32 %v578, 0.9
        %v583 = vadd.f32 %v582, %v558
        %v584 = vsub.f32 %v583, %v581
        %vm585 = vcmp.gt.f32.partialorder %v584, 1.0
        %v586 = vsel %vm585, 1, 0
        %v587 = vcvt.s32.f32 %v586
        %v588 = vmul.f32 %v584, 0.9
        %v589 = vadd.f32 %v588, %v563
        %v590 = vsub.f32 %v589, %v587
        %vm591 = vcmp.gt.f32.partialorder %v590, 1.0
        %v592 = vsel %vm591, 1, 0
        %v593 = vcvt.s32.f32 %v592
        %vm594 = vcmask 130048
        %595 = vst.msk [vmem:[#allocation3] sm:$0xff] %vm594, %v590
        %597 = vrot.lane.b32.xlu0 %v581, 16
        %v598 = vpop.permute.xlu0 %597
        %601 = vrot.lane.b32.xlu0 %v587, 32
        %v602 = vpop.permute.xlu0 %601
        %605 = vrot.lane.b32.xlu0 %v593, 48
        %v606 = vpop.permute.xlu0 %605
        %v608 = vsel %vm594, %v575, %v598
        %v609 = vsel %vm335, %v608, %v602
        %vm610 = vcmask 392192
        %v611 = vsel %vm610, %v609, %v606
        %612 = vst.msk [vmem:[%s287] sm:$0xff] %vm461, %v611
        %614 = vrot.lane.b32.xlu0 %v578, 16
        %v615 = vpop.permute.xlu0 %614
        %618 = vrot.lane.b32.xlu0 %v584, 32
        %v619 = vpop.permute.xlu0 %618
        %622 = vrot.lane.b32.xlu0 %v590, 48
        %v623 = vpop.permute.xlu0 %622
        %v625 = vsel %vm594, %v572, %v615
        %v626 = vsel %vm335, %v625, %v619
        %v627 = vsel %vm610, %v626, %v623
        %628 = vst.msk [vmem:[%s294] sm:$0xff] %vm461, %v627
        %s629 = sand.u32 %s159, 1
        %s630 = scalar_lea.sflag [#allocation6], %s629
        %s631 = sand.u32 %s159, 1
        %s632 = smul.addr %s631, 8
        %s633 = scalar_lea.vmem [#allocation7], %s632
        %s634 = sand.u32 %s187, 1
        %s635 = scalar_lea.sflag [#allocation9], %s634
        %s636 = sand.u32 %s187, 1
        %s637 = smul.addr %s636, 8
        %s638 = scalar_lea.vmem [#allocation8], %s637
        // Predicated region
        $region49: #{tpu_custom_call.1} parent=39 // pred_check
          %p639 = pneg %p169
        $region50: #{tpu_custom_call.1} parent=39 // pred_check_branch
          %641 = sbr.rel (%p639) target = $region52
        $region51: #{tpu_custom_call.1} parent=39 // pred_region
          %s643 = ssub.s32 128, 128
          %644 = vsyncadd %s630, %s643
          %s645 = sadd.s32 %s29, %s30
          %s646 = smul.addr %s645, 128
          %s647 = scalar_lea.hbm %s5, %s646
          %s649 = sshll.u32 %s633, 4
          %s650 = int_to_ptr.vmem [resolvable:$true] %s649
          %652 = dma.vmem_to_hbm [thread:$0]  %s650, 128, %s647, %s630
        $region52: #{tpu_custom_call.1} parent=39 // pred_fallthru
          _
        // Predicated region
        $region53: #{tpu_custom_call.1} parent=39 // pred_check
          %p653 = pneg %p197
        $region54: #{tpu_custom_call.1} parent=39 // pred_check_branch
          %655 = sbr.rel (%p653) target = $region56
        $region55: #{tpu_custom_call.1} parent=39 // pred_region
          %s657 = ssub.s32 128, 128
          %658 = vsyncadd %s635, %s657
          %s659 = sadd.s32 %s29, %s30
          %s660 = smul.addr %s659, 128
          %s661 = scalar_lea.hbm %s6, %s660
          %s663 = sshll.u32 %s638, 4
          %s664 = int_to_ptr.vmem [resolvable:$true] %s663
          %666 = dma.vmem_to_hbm [thread:$0]  %s664, 128, %s661, %s635
        $region56: #{tpu_custom_call.1} parent=39 // pred_fallthru
          _
      $region40: #{tpu_custom_call.1} parent=5 // pred_fallthru
        _
      %p667 = scmp.le.s32.totalorder 2, %s20
      // Predicated region
      $region57: #{tpu_custom_call.1} parent=5 // pred_check
        %p668 = pneg %p667
      $region58: #{tpu_custom_call.1} parent=5 // pred_check_branch
        %670 = sbr.rel (%p668) target = $region60
      $region59: #{tpu_custom_call.1} parent=5 // pred_region
        %s671 = ssub.s32 %s20, 2
        // Predicated region
        $region61: #{tpu_custom_call.1} parent=59 // pred_check
          %p672 = pneg %p175
        $region62: #{tpu_custom_call.1} parent=59 // pred_check_branch
          %674 = sbr.rel (%p672) target = $region64
        $region63: #{tpu_custom_call.1} parent=59 // pred_region
          %s675 = sand.u32 %s160, 1
          %s676 = scalar_lea.sflag [#allocation6], %s675
          %s677 = sand.u32 %s160, 1
          %s678 = smul.addr %s677, 8
          %s679 = scalar_lea.vmem [#allocation7], %s678
          %680 = dma.done %s676, 128
        $region64: #{tpu_custom_call.1} parent=59 // pred_fallthru
          _
        // Predicated region
        $region65: #{tpu_custom_call.1} parent=59 // pred_check
          %p681 = pneg %p203
        $region66: #{tpu_custom_call.1} parent=59 // pred_check_branch
          %683 = sbr.rel (%p681) target = $region68
        $region67: #{tpu_custom_call.1} parent=59 // pred_region
          %s684 = sand.u32 %s188, 1
          %s685 = scalar_lea.sflag [#allocation9], %s684
          %s686 = sand.u32 %s188, 1
          %s687 = smul.addr %s686, 8
          %s688 = scalar_lea.vmem [#allocation8], %s687
          %689 = dma.done %s685, 128
        $region68: #{tpu_custom_call.1} parent=59 // pred_fallthru
          _
      $region60: #{tpu_custom_call.1} parent=5 // pred_fallthru
        _
    $region6: #{tpu_custom_call.1} parent=1 // loop_footer
      %s24 = sadd.s32 1, %s20
    $region7: #{tpu_custom_call.1} parent=1 // loop_footer_branch
      %19 = sbr.rel target = $region3
    $region8: #{tpu_custom_call.1} parent=1 // loop_exit
      _
    %690 = vsyncpa [#allocation5], 1
    %s691 = scalar_lea.sflag [#allocation5], 1
    %692 = vsyncpa %s691, 1
    %693 = vsyncpa [#allocation6], 1
    %s694 = scalar_lea.sflag [#allocation6], 1
    %695 = vsyncpa %s694, 1
    %696 = vsyncpa [#allocation9], 1
    %s697 = scalar_lea.sflag [#allocation9], 1
    %698 = vsyncpa %s697, 1

</llo_original>
